<compile_context>
chip_gen: v5e
topology: v5e:2x2
jax: 0.10.0
libtpu: 0.0.40
codegen_flags: <defaults>
</compile_context>

<pallas_src>
import functools

import jax
import jax.numpy as jnp
from jax import lax
from jax.experimental import pallas as pl
from jax.experimental.pallas import tpu as pltpu


def aie_kernel(p_ref, q_ref, wp_ref, wq_ref, wh_ref, out_ref, *, A, h1, h2):
    f32 = jnp.float32

    Pf = p_ref[...]                       # (Bblk, A*h1)  flattened userAspRep
    Qf = q_ref[...]                       # (Bblk, A*h1)  flattened itemAspRep
    Bblk = Pf.shape[0]
    Wp = wp_ref[...]                      # (A*h1, A*h1 + A*h2) = [bdiag(W_a) | bdiag(W_u^T)]
    Wq = wq_ref[...]                      # (A*h1, A*h2)        =  bdiag(W_i^T)
    wh = wh_ref[...]                      # (2, h2): row0 = w_hu^T, row1 = w_hi^T

    # --- All shared-weight matmuls as two big-K (K = A*h1) MXU dots. ---
    PW = jnp.dot(Pf, Wp, preferred_element_type=f32)        # (Bblk, A*(h1+h2))
    QWi_f = jnp.dot(Qf, Wq, preferred_element_type=f32)     # (Bblk, A*h2)

    PWa = PW[:, : A * h1].reshape(Bblk, A, h1)              # P @ W_a
    PWu = PW[:, A * h1:].reshape(Bblk, A, h2)               # P @ W_u^T
    QWi = QWi_f.reshape(Bblk, A, h2)                        # Q @ W_i^T
    Q3 = Qf.reshape(Bblk, A, h1)

    # --- Affinity-mixed terms, unrolled over the A-sized contraction index so
    # the K=A=8 contractions stay on the VPU (broadcast MACs) instead of
    # lowering to Bblk tiny batched MXU matmuls.  S is never materialized:
    #   S[b, x, y]   = relu(sum_j PWa[b, x, j] * Q[b, y, j])
    #   mix_u[b,a,h] = sum_k S[b, k, a] * QWi[b, k, h]
    #   mix_i[b,a,h] = sum_k S[b, a, k] * PWu[b, k, h]
    mix_u = jnp.zeros((Bblk, A, h2), f32)
    mix_i = jnp.zeros((Bblk, A, h2), f32)
    for k in range(A):
        s_row_k = jnp.maximum(                              # (Bblk, A, 1) = S[:, k, :]
            jnp.sum(PWa[:, k:k + 1, :] * Q3, axis=-1, keepdims=True), 0.0)
        s_col_k = jnp.maximum(                              # (Bblk, A, 1) = S[:, :, k]
            jnp.sum(PWa * Q3[:, k:k + 1, :], axis=-1, keepdims=True), 0.0)
        mix_u = mix_u + s_row_k * QWi[:, k:k + 1, :]
        mix_i = mix_i + s_col_k * PWu[:, k:k + 1, :]

    HuT = jnp.maximum(PWu + mix_u, 0.0)                     # (Bblk, A, h2) = H_u^T
    HiT = jnp.maximum(QWi + mix_i, 0.0)                     # (Bblk, A, h2) = H_i^T

    # --- Aspect-importance scores: VPU multiply + lane reduce over h2. ---
    w_hu = wh[0:1, :].reshape(1, 1, h2)
    w_hi = wh[1:2, :].reshape(1, 1, h2)
    u_scores = jnp.sum(HuT * w_hu, axis=-1)                 # (Bblk, A)
    i_scores = jnp.sum(HiT * w_hi, axis=-1)                 # (Bblk, A)

    # --- Stable softmax over the aspect axis (EUP exp + approx reciprocal).
    def softmax_last(s):
        m = jnp.max(s, axis=-1, keepdims=True)
        e = jnp.exp(s - m)
        return e * pl.reciprocal(jnp.sum(e, axis=-1, keepdims=True), approx=True)

    fused = jnp.concatenate([softmax_last(u_scores), softmax_last(i_scores)],
                            axis=-1)                        # (Bblk, 2A)

    # --- Lane-dense output: (2A, Bblk) with the batch on the lane axis.
    # Transpose expressed as identity @ fused^T (A @ B^T MXU pattern); each
    # output column depends only on its own batch row, so masked tail rows
    # cannot pollute valid outputs.
    rows = lax.broadcasted_iota(jnp.int32, (2 * A, 2 * A), 0)
    cols = lax.broadcasted_iota(jnp.int32, (2 * A, 2 * A), 1)
    ident = jnp.where(rows == cols, 1.0, 0.0).astype(f32)
    out_ref[...] = lax.dot_general(ident, fused, (((1,), (1,)), ((), ())),
                                   preferred_element_type=f32)


def _block_diag(W, A):
    """(r, c) -> (A*r, A*c) block-diagonal with A copies of W on the diagonal."""
    r, c = W.shape
    eye = jnp.eye(A, dtype=W.dtype)
    return (eye[:, None, :, None] * W[None, :, None, :]).reshape(A * r, A * c)


def _choose_batch_block(bsz):
    # Small batches: single grid step (block dims equal full array dims, so no
    # (8,128) divisibility issue).  Larger batches: block must be a multiple
    # of 128 (batch sits on the lane axis of the output), we want >= 2 grid
    # steps so v7x's two TensorCores both get work, and we cap the block so
    # the per-step VMEM footprint stays comfortable on v7x (64 MiB).
    if bsz <= 256:
        return bsz
    if bsz >= 1024:
        return 512
    return 128 * max(1, (bsz // 2) // 128)


def anr_aie_forward(userAspRep, itemAspRep, W_a, W_u, w_hu, W_i, w_hi):
    f32 = jnp.float32
    bsz, A, h1 = userAspRep.shape
    h2 = W_u.shape[0]

    # Lane-dense inputs: (bsz, A*h1).  A*h1 = 128 for the ANR defaults, so the
    # input DMA carries fully packed rows (~8x fewer bytes than (A, h1=16)
    # tiles padded to (8, 128)).  The reshape is metadata-only in XLA.
    P_flat = jnp.asarray(userAspRep, f32).reshape(bsz, A * h1)
    Q_flat = jnp.asarray(itemAspRep, f32).reshape(bsz, A * h1)

    # One-time block-diagonal weight packing (raises the shared-weight matmul
    # contraction depth from K=h1=16 to K=A*h1=128).
    W_a = jnp.asarray(W_a, f32)
    W_uT = jnp.asarray(W_u, f32).T                          # (h1, h2)
    W_iT = jnp.asarray(W_i, f32).T                          # (h1, h2)
    Wp = jnp.concatenate([_block_diag(W_a, A), _block_diag(W_uT, A)], axis=1)
    Wq = _block_diag(W_iT, A)                               # (A*h1, A*h2)
    w_h = jnp.stack([jnp.asarray(w_hu, f32)[:, 0],
                     jnp.asarray(w_hi, f32)[:, 0]], axis=0)  # (2, h2)

    Bblk = _choose_batch_block(bsz)
    # No jnp.pad: the (row-independent) tail block, if any, is a masked edge
    # block handled by the Pallas pipeline.
    grid = (pl.cdiv(bsz, Bblk),)

    # NOTE: the weight in_specs use constant index maps so they are fetched
    # once; at these sizes double-buffering them costs <1 MiB, so we skip
    # pipeline_mode=pl.Buffered(1).
    out = pl.pallas_call(
        functools.partial(aie_kernel, A=A, h1=h1, h2=h2),
        out_shape=jax.ShapeDtypeStruct((2 * A, bsz), f32),
        grid_spec=pltpu.PrefetchScalarGridSpec(
            num_scalar_prefetch=0,
            grid=grid,
            in_specs=[
                pl.BlockSpec((Bblk, A * h1), lambda b: (b, 0)),           # P_flat
                pl.BlockSpec((Bblk, A * h1), lambda b: (b, 0)),           # Q_flat
                pl.BlockSpec((A * h1, A * (h1 + h2)), lambda b: (0, 0)),  # Wp
                pl.BlockSpec((A * h1, A * h2), lambda b: (0, 0)),         # Wq
                pl.BlockSpec((2, h2), lambda b: (0, 0)),                  # w_h
            ],
            out_specs=pl.BlockSpec((2 * A, Bblk), lambda b: (0, b)),
        ),
        compiler_params=pltpu.CompilerParams(
            dimension_semantics=("parallel",),
            vmem_limit_bytes=48 * 1024 * 1024,
        ),
    )(P_flat, Q_flat, Wp, Wq, w_h)

    out_u = jnp.transpose(out[:A, :])                       # (bsz, A)
    out_i = jnp.transpose(out[A:, :])                       # (bsz, A)
    return out_u, out_i


def anr_aie_reference(userAspRep, itemAspRep, W_a, W_u, w_hu, W_i, w_hi):
    """Pure-JAX replica of the PyTorch forward (for correctness check)."""
    uT = jnp.swapaxes(userAspRep, 1, 2)                     # (b, h1, A)
    iT = jnp.swapaxes(itemAspRep, 1, 2)                     # (b, h1, A)
    S = jax.nn.relu(jnp.matmul(jnp.matmul(userAspRep, W_a), iT))   # (b, A, A)

    H_u = jax.nn.relu(jnp.matmul(W_u, uT) + jnp.matmul(jnp.matmul(W_i, iT), S))
    u_imp = jnp.matmul(w_hu.T, H_u)                         # (b, 1, A)
    u_imp = jnp.swapaxes(u_imp, 1, 2)                       # (b, A, 1)
    u_imp = jax.nn.softmax(u_imp, axis=1)[..., 0]           # (b, A)

    H_i = jax.nn.relu(jnp.matmul(W_i, iT) +
                      jnp.matmul(jnp.matmul(W_u, uT), jnp.swapaxes(S, 1, 2)))
    i_imp = jnp.matmul(w_hi.T, H_i)
    i_imp = jnp.swapaxes(i_imp, 1, 2)
    i_imp = jax.nn.softmax(i_imp, axis=1)[..., 0]
    return u_imp, i_imp


if __name__ == "__main__":
    # Small shapes implied by the module: bsz x num_aspects x h1 inputs.
    bsz, num_aspects, h1, h2 = 2, 8, 16, 32

    key = jax.random.PRNGKey(0)
    ku, ki, k1, k2, k3, k4, k5 = jax.random.split(key, 7)

    userAspRep = jax.random.normal(ku, (bsz, num_aspects, h1), dtype=jnp.float32)
    itemAspRep = jax.random.normal(ki, (bsz, num_aspects, h1), dtype=jnp.float32)

    # Deterministic parameter init: uniform(-0.01, 0.01), same as the module.
    W_a = jax.random.uniform(k1, (h1, h1), jnp.float32, -0.01, 0.01)
    W_u = jax.random.uniform(k2, (h2, h1), jnp.float32, -0.01, 0.01)
    w_hu = jax.random.uniform(k3, (h2, 1), jnp.float32, -0.01, 0.01)
    W_i = jax.random.uniform(k4, (h2, h1), jnp.float32, -0.01, 0.01)
    w_hi = jax.random.uniform(k5, (h2, 1), jnp.float32, -0.01, 0.01)

    u_imp, i_imp = anr_aie_forward(userAspRep, itemAspRep, W_a, W_u, w_hu, W_i, w_hi)
    jax.block_until_ready((u_imp, i_imp))

    u_ref, i_ref = anr_aie_reference(userAspRep, itemAspRep, W_a, W_u, w_hu, W_i, w_hi)
    assert u_imp.shape == (bsz, num_aspects) and i_imp.shape == (bsz, num_aspects)
    # approx reciprocal in the in-kernel softmax -> slightly relaxed tolerance.
    assert jnp.allclose(u_imp, u_ref, atol=2e-3, rtol=2e-3)
    assert jnp.allclose(i_imp, i_ref, atol=2e-3, rtol=2e-3)

    print("KERNEL_OK")
</pallas_src>

<mosaic_0001>
module attributes {stable_mosaic.version = 11 : i64} {
  func.func @aie_kernel(%arg0: i32, %arg1: memref<2x128xf32, #tpu.memory_space<vmem>>, %arg2: memref<2x128xf32, #tpu.memory_space<vmem>>, %arg3: memref<128x384xf32, #tpu.memory_space<vmem>>, %arg4: memref<128x256xf32, #tpu.memory_space<vmem>>, %arg5: memref<2x32xf32, #tpu.memory_space<vmem>>, %arg6: memref<16x2xf32, #tpu.memory_space<vmem>>) attributes {dimension_semantics = [#tpu.dimension_semantics<parallel>], iteration_bounds = array<i64: 1>, scalar_prefetch = 0 : i64, scratch_operands = 0 : i64, tpu.core_type = #tpu.core_type<tc>, window_params = [{transform_indices = @transform_0, window_bounds = array<i64: 2, 128>}, {transform_indices = @transform_1, window_bounds = array<i64: 2, 128>}, {pipeline_mode = #tpu.pipeline_mode<synchronous>, transform_indices = @transform_2, window_bounds = array<i64: 128, 384>}, {pipeline_mode = #tpu.pipeline_mode<synchronous>, transform_indices = @transform_3, window_bounds = array<i64: 128, 256>}, {pipeline_mode = #tpu.pipeline_mode<synchronous>, transform_indices = @transform_4, window_bounds = array<i64: 2, 32>}, {transform_indices = @transform_5, window_bounds = array<i64: 16, 2>}]} {
    %c0 = arith.constant 0 : index
    %c0_0 = arith.constant 0 : index
    %0 = vector.load %arg1[%c0, %c0_0] : memref<2x128xf32, #tpu.memory_space<vmem>>, vector<2x128xf32>
    %c0_1 = arith.constant 0 : index
    %c0_2 = arith.constant 0 : index
    %1 = vector.load %arg2[%c0_1, %c0_2] : memref<2x128xf32, #tpu.memory_space<vmem>>, vector<2x128xf32>
    %c0_3 = arith.constant 0 : index
    %c0_4 = arith.constant 0 : index
    %2 = vector.load %arg3[%c0_3, %c0_4] : memref<128x384xf32, #tpu.memory_space<vmem>>, vector<128x384xf32>
    %c0_5 = arith.constant 0 : index
    %c0_6 = arith.constant 0 : index
    %3 = vector.load %arg4[%c0_5, %c0_6] : memref<128x256xf32, #tpu.memory_space<vmem>>, vector<128x256xf32>
    %c0_7 = arith.constant 0 : index
    %c0_8 = arith.constant 0 : index
    %4 = vector.load %arg5[%c0_7, %c0_8] : memref<2x32xf32, #tpu.memory_space<vmem>>, vector<2x32xf32>
    %cst = arith.constant dense<0.000000e+00> : vector<2x384xf32>
    %5 = tpu.matmul %0, %2, %cst {dimension_numbers = #tpu.dot_dimension_numbers<[1], [0], [0], [1], [0, 0, 1, 1], [], []>} : vector<2x128xf32>, vector<128x384xf32>, vector<2x384xf32> -> vector<2x384xf32>
    %cst_9 = arith.constant dense<0.000000e+00> : vector<2x256xf32>
    %6 = tpu.matmul %1, %3, %cst_9 {dimension_numbers = #tpu.dot_dimension_numbers<[1], [0], [0], [1], [0, 0, 1, 1], [], []>} : vector<2x128xf32>, vector<128x256xf32>, vector<2x256xf32> -> vector<2x256xf32>
    %7 = vector.extract_strided_slice %5 {offsets = [0, 0], sizes = [2, 128], strides = [1, 1]} : vector<2x384xf32> to vector<2x128xf32>
    %8 = vector.shape_cast %7 : vector<2x128xf32> to vector<2x8x16xf32>
    %9 = vector.extract_strided_slice %5 {offsets = [0, 128], sizes = [2, 256], strides = [1, 1]} : vector<2x384xf32> to vector<2x256xf32>
    %10 = vector.shape_cast %9 : vector<2x256xf32> to vector<2x8x32xf32>
    %11 = vector.shape_cast %6 : vector<2x256xf32> to vector<2x8x32xf32>
    %12 = vector.shape_cast %1 : vector<2x128xf32> to vector<2x8x16xf32>
    %cst_10 = arith.constant 0.000000e+00 : f32
    %13 = vector.broadcast %cst_10 : f32 to vector<2x8x32xf32>
    %cst_11 = arith.constant 0.000000e+00 : f32
    %14 = vector.broadcast %cst_11 : f32 to vector<2x8x32xf32>
    %15 = vector.extract_strided_slice %8 {offsets = [0, 0, 0], sizes = [2, 1, 16], strides = [1, 1, 1]} : vector<2x8x16xf32> to vector<2x1x16xf32>
    %16 = vector.broadcast %15 : vector<2x1x16xf32> to vector<2x8x16xf32>
    %17 = arith.mulf %16, %12 : vector<2x8x16xf32>
    %cst_12 = arith.constant dense<0.000000e+00> : vector<2x8xf32>
    %18 = vector.multi_reduction <add>, %17, %cst_12 [2] : vector<2x8x16xf32> to vector<2x8xf32>
    %19 = vector.shape_cast %18 : vector<2x8xf32> to vector<2x8x1xf32>
    %cst_13 = arith.constant 0.000000e+00 : f32
    %20 = vector.broadcast %cst_13 : f32 to vector<2x8x1xf32>
    %21 = arith.maximumf %19, %20 : vector<2x8x1xf32>
    %22 = vector.extract_strided_slice %12 {offsets = [0, 0, 0], sizes = [2, 1, 16], strides = [1, 1, 1]} : vector<2x8x16xf32> to vector<2x1x16xf32>
    %23 = vector.broadcast %22 : vector<2x1x16xf32> to vector<2x8x16xf32>
    %24 = arith.mulf %8, %23 : vector<2x8x16xf32>
    %cst_14 = arith.constant dense<0.000000e+00> : vector<2x8xf32>
    %25 = vector.multi_reduction <add>, %24, %cst_14 [2] : vector<2x8x16xf32> to vector<2x8xf32>
    %26 = vector.shape_cast %25 : vector<2x8xf32> to vector<2x8x1xf32>
    %cst_15 = arith.constant 0.000000e+00 : f32
    %27 = vector.broadcast %cst_15 : f32 to vector<2x8x1xf32>
    %28 = arith.maximumf %26, %27 : vector<2x8x1xf32>
    %29 = vector.extract_strided_slice %11 {offsets = [0, 0, 0], sizes = [2, 1, 32], strides = [1, 1, 1]} : vector<2x8x32xf32> to vector<2x1x32xf32>
    %30 = vector.broadcast %21 : vector<2x8x1xf32> to vector<2x8x32xf32>
    %31 = vector.broadcast %29 : vector<2x1x32xf32> to vector<2x8x32xf32>
    %32 = arith.mulf %30, %31 : vector<2x8x32xf32>
    %33 = arith.addf %13, %32 : vector<2x8x32xf32>
    %34 = vector.extract_strided_slice %10 {offsets = [0, 0, 0], sizes = [2, 1, 32], strides = [1, 1, 1]} : vector<2x8x32xf32> to vector<2x1x32xf32>
    %35 = vector.broadcast %28 : vector<2x8x1xf32> to vector<2x8x32xf32>
    %36 = vector.broadcast %34 : vector<2x1x32xf32> to vector<2x8x32xf32>
    %37 = arith.mulf %35, %36 : vector<2x8x32xf32>
    %38 = arith.addf %14, %37 : vector<2x8x32xf32>
    %39 = vector.extract_strided_slice %8 {offsets = [0, 1, 0], sizes = [2, 1, 16], strides = [1, 1, 1]} : vector<2x8x16xf32> to vector<2x1x16xf32>
    %40 = vector.broadcast %39 : vector<2x1x16xf32> to vector<2x8x16xf32>
    %41 = arith.mulf %40, %12 : vector<2x8x16xf32>
    %cst_16 = arith.constant dense<0.000000e+00> : vector<2x8xf32>
    %42 = vector.multi_reduction <add>, %41, %cst_16 [2] : vector<2x8x16xf32> to vector<2x8xf32>
    %43 = vector.shape_cast %42 : vector<2x8xf32> to vector<2x8x1xf32>
    %cst_17 = arith.constant 0.000000e+00 : f32
    %44 = vector.broadcast %cst_17 : f32 to vector<2x8x1xf32>
    %45 = arith.maximumf %43, %44 : vector<2x8x1xf32>
    %46 = vector.extract_strided_slice %12 {offsets = [0, 1, 0], sizes = [2, 1, 16], strides = [1, 1, 1]} : vector<2x8x16xf32> to vector<2x1x16xf32>
    %47 = vector.broadcast %46 : vector<2x1x16xf32> to vector<2x8x16xf32>
    %48 = arith.mulf %8, %47 : vector<2x8x16xf32>
    %cst_18 = arith.constant dense<0.000000e+00> : vector<2x8xf32>
    %49 = vector.multi_reduction <add>, %48, %cst_18 [2] : vector<2x8x16xf32> to vector<2x8xf32>
    %50 = vector.shape_cast %49 : vector<2x8xf32> to vector<2x8x1xf32>
    %cst_19 = arith.constant 0.000000e+00 : f32
    %51 = vector.broadcast %cst_19 : f32 to vector<2x8x1xf32>
    %52 = arith.maximumf %50, %51 : vector<2x8x1xf32>
    %53 = vector.extract_strided_slice %11 {offsets = [0, 1, 0], sizes = [2, 1, 32], strides = [1, 1, 1]} : vector<2x8x32xf32> to vector<2x1x32xf32>
    %54 = vector.broadcast %45 : vector<2x8x1xf32> to vector<2x8x32xf32>
    %55 = vector.broadcast %53 : vector<2x1x32xf32> to vector<2x8x32xf32>
    %56 = arith.mulf %54, %55 : vector<2x8x32xf32>
    %57 = arith.addf %33, %56 : vector<2x8x32xf32>
    %58 = vector.extract_strided_slice %10 {offsets = [0, 1, 0], sizes = [2, 1, 32], strides = [1, 1, 1]} : vector<2x8x32xf32> to vector<2x1x32xf32>
    %59 = vector.broadcast %52 : vector<2x8x1xf32> to vector<2x8x32xf32>
    %60 = vector.broadcast %58 : vector<2x1x32xf32> to vector<2x8x32xf32>
    %61 = arith.mulf %59, %60 : vector<2x8x32xf32>
    %62 = arith.addf %38, %61 : vector<2x8x32xf32>
    %63 = vector.extract_strided_slice %8 {offsets = [0, 2, 0], sizes = [2, 1, 16], strides = [1, 1, 1]} : vector<2x8x16xf32> to vector<2x1x16xf32>
    %64 = vector.broadcast %63 : vector<2x1x16xf32> to vector<2x8x16xf32>
    %65 = arith.mulf %64, %12 : vector<2x8x16xf32>
    %cst_20 = arith.constant dense<0.000000e+00> : vector<2x8xf32>
    %66 = vector.multi_reduction <add>, %65, %cst_20 [2] : vector<2x8x16xf32> to vector<2x8xf32>
    %67 = vector.shape_cast %66 : vector<2x8xf32> to vector<2x8x1xf32>
    %cst_21 = arith.constant 0.000000e+00 : f32
    %68 = vector.broadcast %cst_21 : f32 to vector<2x8x1xf32>
    %69 = arith.maximumf %67, %68 : vector<2x8x1xf32>
    %70 = vector.extract_strided_slice %12 {offsets = [0, 2, 0], sizes = [2, 1, 16], strides = [1, 1, 1]} : vector<2x8x16xf32> to vector<2x1x16xf32>
    %71 = vector.broadcast %70 : vector<2x1x16xf32> to vector<2x8x16xf32>
    %72 = arith.mulf %8, %71 : vector<2x8x16xf32>
    %cst_22 = arith.constant dense<0.000000e+00> : vector<2x8xf32>
    %73 = vector.multi_reduction <add>, %72, %cst_22 [2] : vector<2x8x16xf32> to vector<2x8xf32>
    %74 = vector.shape_cast %73 : vector<2x8xf32> to vector<2x8x1xf32>
    %cst_23 = arith.constant 0.000000e+00 : f32
    %75 = vector.broadcast %cst_23 : f32 to vector<2x8x1xf32>
    %76 = arith.maximumf %74, %75 : vector<2x8x1xf32>
    %77 = vector.extract_strided_slice %11 {offsets = [0, 2, 0], sizes = [2, 1, 32], strides = [1, 1, 1]} : vector<2x8x32xf32> to vector<2x1x32xf32>
    %78 = vector.broadcast %69 : vector<2x8x1xf32> to vector<2x8x32xf32>
    %79 = vector.broadcast %77 : vector<2x1x32xf32> to vector<2x8x32xf32>
    %80 = arith.mulf %78, %79 : vector<2x8x32xf32>
    %81 = arith.addf %57, %80 : vector<2x8x32xf32>
    %82 = vector.extract_strided_slice %10 {offsets = [0, 2, 0], sizes = [2, 1, 32], strides = [1, 1, 1]} : vector<2x8x32xf32> to vector<2x1x32xf32>
    %83 = vector.broadcast %76 : vector<2x8x1xf32> to vector<2x8x32xf32>
    %84 = vector.broadcast %82 : vector<2x1x32xf32> to vector<2x8x32xf32>
    %85 = arith.mulf %83, %84 : vector<2x8x32xf32>
    %86 = arith.addf %62, %85 : vector<2x8x32xf32>
    %87 = vector.extract_strided_slice %8 {offsets = [0, 3, 0], sizes = [2, 1, 16], strides = [1, 1, 1]} : vector<2x8x16xf32> to vector<2x1x16xf32>
    %88 = vector.broadcast %87 : vector<2x1x16xf32> to vector<2x8x16xf32>
    %89 = arith.mulf %88, %12 : vector<2x8x16xf32>
    %cst_24 = arith.constant dense<0.000000e+00> : vector<2x8xf32>
    %90 = vector.multi_reduction <add>, %89, %cst_24 [2] : vector<2x8x16xf32> to vector<2x8xf32>
    %91 = vector.shape_cast %90 : vector<2x8xf32> to vector<2x8x1xf32>
    %cst_25 = arith.constant 0.000000e+00 : f32
    %92 = vector.broadcast %cst_25 : f32 to vector<2x8x1xf32>
    %93 = arith.maximumf %91, %92 : vector<2x8x1xf32>
    %94 = vector.extract_strided_slice %12 {offsets = [0, 3, 0], sizes = [2, 1, 16], strides = [1, 1, 1]} : vector<2x8x16xf32> to vector<2x1x16xf32>
    %95 = vector.broadcast %94 : vector<2x1x16xf32> to vector<2x8x16xf32>
    %96 = arith.mulf %8, %95 : vector<2x8x16xf32>
    %cst_26 = arith.constant dense<0.000000e+00> : vector<2x8xf32>
    %97 = vector.multi_reduction <add>, %96, %cst_26 [2] : vector<2x8x16xf32> to vector<2x8xf32>
    %98 = vector.shape_cast %97 : vector<2x8xf32> to vector<2x8x1xf32>
    %cst_27 = arith.constant 0.000000e+00 : f32
    %99 = vector.broadcast %cst_27 : f32 to vector<2x8x1xf32>
    %100 = arith.maximumf %98, %99 : vector<2x8x1xf32>
    %101 = vector.extract_strided_slice %11 {offsets = [0, 3, 0], sizes = [2, 1, 32], strides = [1, 1, 1]} : vector<2x8x32xf32> to vector<2x1x32xf32>
    %102 = vector.broadcast %93 : vector<2x8x1xf32> to vector<2x8x32xf32>
    %103 = vector.broadcast %101 : vector<2x1x32xf32> to vector<2x8x32xf32>
    %104 = arith.mulf %102, %103 : vector<2x8x32xf32>
    %105 = arith.addf %81, %104 : vector<2x8x32xf32>
    %106 = vector.extract_strided_slice %10 {offsets = [0, 3, 0], sizes = [2, 1, 32], strides = [1, 1, 1]} : vector<2x8x32xf32> to vector<2x1x32xf32>
    %107 = vector.broadcast %100 : vector<2x8x1xf32> to vector<2x8x32xf32>
    %108 = vector.broadcast %106 : vector<2x1x32xf32> to vector<2x8x32xf32>
    %109 = arith.mulf %107, %108 : vector<2x8x32xf32>
    %110 = arith.addf %86, %109 : vector<2x8x32xf32>
    %111 = vector.extract_strided_slice %8 {offsets = [0, 4, 0], sizes = [2, 1, 16], strides = [1, 1, 1]} : vector<2x8x16xf32> to vector<2x1x16xf32>
    %112 = vector.broadcast %111 : vector<2x1x16xf32> to vector<2x8x16xf32>
    %113 = arith.mulf %112, %12 : vector<2x8x16xf32>
    %cst_28 = arith.constant dense<0.000000e+00> : vector<2x8xf32>
    %114 = vector.multi_reduction <add>, %113, %cst_28 [2] : vector<2x8x16xf32> to vector<2x8xf32>
    %115 = vector.shape_cast %114 : vector<2x8xf32> to vector<2x8x1xf32>
    %cst_29 = arith.constant 0.000000e+00 : f32
    %116 = vector.broadcast %cst_29 : f32 to vector<2x8x1xf32>
    %117 = arith.maximumf %115, %116 : vector<2x8x1xf32>
    %118 = vector.extract_strided_slice %12 {offsets = [0, 4, 0], sizes = [2, 1, 16], strides = [1, 1, 1]} : vector<2x8x16xf32> to vector<2x1x16xf32>
    %119 = vector.broadcast %118 : vector<2x1x16xf32> to vector<2x8x16xf32>
    %120 = arith.mulf %8, %119 : vector<2x8x16xf32>
    %cst_30 = arith.constant dense<0.000000e+00> : vector<2x8xf32>
    %121 = vector.multi_reduction <add>, %120, %cst_30 [2] : vector<2x8x16xf32> to vector<2x8xf32>
    %122 = vector.shape_cast %121 : vector<2x8xf32> to vector<2x8x1xf32>
    %cst_31 = arith.constant 0.000000e+00 : f32
    %123 = vector.broadcast %cst_31 : f32 to vector<2x8x1xf32>
    %124 = arith.maximumf %122, %123 : vector<2x8x1xf32>
    %125 = vector.extract_strided_slice %11 {offsets = [0, 4, 0], sizes = [2, 1, 32], strides = [1, 1, 1]} : vector<2x8x32xf32> to vector<2x1x32xf32>
    %126 = vector.broadcast %117 : vector<2x8x1xf32> to vector<2x8x32xf32>
    %127 = vector.broadcast %125 : vector<2x1x32xf32> to vector<2x8x32xf32>
    %128 = arith.mulf %126, %127 : vector<2x8x32xf32>
    %129 = arith.addf %105, %128 : vector<2x8x32xf32>
    %130 = vector.extract_strided_slice %10 {offsets = [0, 4, 0], sizes = [2, 1, 32], strides = [1, 1, 1]} : vector<2x8x32xf32> to vector<2x1x32xf32>
    %131 = vector.broadcast %124 : vector<2x8x1xf32> to vector<2x8x32xf32>
    %132 = vector.broadcast %130 : vector<2x1x32xf32> to vector<2x8x32xf32>
    %133 = arith.mulf %131, %132 : vector<2x8x32xf32>
    %134 = arith.addf %110, %133 : vector<2x8x32xf32>
    %135 = vector.extract_strided_slice %8 {offsets = [0, 5, 0], sizes = [2, 1, 16], strides = [1, 1, 1]} : vector<2x8x16xf32> to vector<2x1x16xf32>
    %136 = vector.broadcast %135 : vector<2x1x16xf32> to vector<2x8x16xf32>
    %137 = arith.mulf %136, %12 : vector<2x8x16xf32>
    %cst_32 = arith.constant dense<0.000000e+00> : vector<2x8xf32>
    %138 = vector.multi_reduction <add>, %137, %cst_32 [2] : vector<2x8x16xf32> to vector<2x8xf32>
    %139 = vector.shape_cast %138 : vector<2x8xf32> to vector<2x8x1xf32>
    %cst_33 = arith.constant 0.000000e+00 : f32
    %140 = vector.broadcast %cst_33 : f32 to vector<2x8x1xf32>
    %141 = arith.maximumf %139, %140 : vector<2x8x1xf32>
    %142 = vector.extract_strided_slice %12 {offsets = [0, 5, 0], sizes = [2, 1, 16], strides = [1, 1, 1]} : vector<2x8x16xf32> to vector<2x1x16xf32>
    %143 = vector.broadcast %142 : vector<2x1x16xf32> to vector<2x8x16xf32>
    %144 = arith.mulf %8, %143 : vector<2x8x16xf32>
    %cst_34 = arith.constant dense<0.000000e+00> : vector<2x8xf32>
    %145 = vector.multi_reduction <add>, %144, %cst_34 [2] : vector<2x8x16xf32> to vector<2x8xf32>
    %146 = vector.shape_cast %145 : vector<2x8xf32> to vector<2x8x1xf32>
    %cst_35 = arith.constant 0.000000e+00 : f32
    %147 = vector.broadcast %cst_35 : f32 to vector<2x8x1xf32>
    %148 = arith.maximumf %146, %147 : vector<2x8x1xf32>
    %149 = vector.extract_strided_slice %11 {offsets = [0, 5, 0], sizes = [2, 1, 32], strides = [1, 1, 1]} : vector<2x8x32xf32> to vector<2x1x32xf32>
    %150 = vector.broadcast %141 : vector<2x8x1xf32> to vector<2x8x32xf32>
    %151 = vector.broadcast %149 : vector<2x1x32xf32> to vector<2x8x32xf32>
    %152 = arith.mulf %150, %151 : vector<2x8x32xf32>
    %153 = arith.addf %129, %152 : vector<2x8x32xf32>
    %154 = vector.extract_strided_slice %10 {offsets = [0, 5, 0], sizes = [2, 1, 32], strides = [1, 1, 1]} : vector<2x8x32xf32> to vector<2x1x32xf32>
    %155 = vector.broadcast %148 : vector<2x8x1xf32> to vector<2x8x32xf32>
    %156 = vector.broadcast %154 : vector<2x1x32xf32> to vector<2x8x32xf32>
    %157 = arith.mulf %155, %156 : vector<2x8x32xf32>
    %158 = arith.addf %134, %157 : vector<2x8x32xf32>
    %159 = vector.extract_strided_slice %8 {offsets = [0, 6, 0], sizes = [2, 1, 16], strides = [1, 1, 1]} : vector<2x8x16xf32> to vector<2x1x16xf32>
    %160 = vector.broadcast %159 : vector<2x1x16xf32> to vector<2x8x16xf32>
    %161 = arith.mulf %160, %12 : vector<2x8x16xf32>
    %cst_36 = arith.constant dense<0.000000e+00> : vector<2x8xf32>
    %162 = vector.multi_reduction <add>, %161, %cst_36 [2] : vector<2x8x16xf32> to vector<2x8xf32>
    %163 = vector.shape_cast %162 : vector<2x8xf32> to vector<2x8x1xf32>
    %cst_37 = arith.constant 0.000000e+00 : f32
    %164 = vector.broadcast %cst_37 : f32 to vector<2x8x1xf32>
    %165 = arith.maximumf %163, %164 : vector<2x8x1xf32>
    %166 = vector.extract_strided_slice %12 {offsets = [0, 6, 0], sizes = [2, 1, 16], strides = [1, 1, 1]} : vector<2x8x16xf32> to vector<2x1x16xf32>
    %167 = vector.broadcast %166 : vector<2x1x16xf32> to vector<2x8x16xf32>
    %168 = arith.mulf %8, %167 : vector<2x8x16xf32>
    %cst_38 = arith.constant dense<0.000000e+00> : vector<2x8xf32>
    %169 = vector.multi_reduction <add>, %168, %cst_38 [2] : vector<2x8x16xf32> to vector<2x8xf32>
    %170 = vector.shape_cast %169 : vector<2x8xf32> to vector<2x8x1xf32>
    %cst_39 = arith.constant 0.000000e+00 : f32
    %171 = vector.broadcast %cst_39 : f32 to vector<2x8x1xf32>
    %172 = arith.maximumf %170, %171 : vector<2x8x1xf32>
    %173 = vector.extract_strided_slice %11 {offsets = [0, 6, 0], sizes = [2, 1, 32], strides = [1, 1, 1]} : vector<2x8x32xf32> to vector<2x1x32xf32>
    %174 = vector.broadcast %165 : vector<2x8x1xf32> to vector<2x8x32xf32>
    %175 = vector.broadcast %173 : vector<2x1x32xf32> to vector<2x8x32xf32>
    %176 = arith.mulf %174, %175 : vector<2x8x32xf32>
    %177 = arith.addf %153, %176 : vector<2x8x32xf32>
    %178 = vector.extract_strided_slice %10 {offsets = [0, 6, 0], sizes = [2, 1, 32], strides = [1, 1, 1]} : vector<2x8x32xf32> to vector<2x1x32xf32>
    %179 = vector.broadcast %172 : vector<2x8x1xf32> to vector<2x8x32xf32>
    %180 = vector.broadcast %178 : vector<2x1x32xf32> to vector<2x8x32xf32>
    %181 = arith.mulf %179, %180 : vector<2x8x32xf32>
    %182 = arith.addf %158, %181 : vector<2x8x32xf32>
    %183 = vector.extract_strided_slice %8 {offsets = [0, 7, 0], sizes = [2, 1, 16], strides = [1, 1, 1]} : vector<2x8x16xf32> to vector<2x1x16xf32>
    %184 = vector.broadcast %183 : vector<2x1x16xf32> to vector<2x8x16xf32>
    %185 = arith.mulf %184, %12 : vector<2x8x16xf32>
    %cst_40 = arith.constant dense<0.000000e+00> : vector<2x8xf32>
    %186 = vector.multi_reduction <add>, %185, %cst_40 [2] : vector<2x8x16xf32> to vector<2x8xf32>
    %187 = vector.shape_cast %186 : vector<2x8xf32> to vector<2x8x1xf32>
    %cst_41 = arith.constant 0.000000e+00 : f32
    %188 = vector.broadcast %cst_41 : f32 to vector<2x8x1xf32>
    %189 = arith.maximumf %187, %188 : vector<2x8x1xf32>
    %190 = vector.extract_strided_slice %12 {offsets = [0, 7, 0], sizes = [2, 1, 16], strides = [1, 1, 1]} : vector<2x8x16xf32> to vector<2x1x16xf32>
    %191 = vector.broadcast %190 : vector<2x1x16xf32> to vector<2x8x16xf32>
    %192 = arith.mulf %8, %191 : vector<2x8x16xf32>
    %cst_42 = arith.constant dense<0.000000e+00> : vector<2x8xf32>
    %193 = vector.multi_reduction <add>, %192, %cst_42 [2] : vector<2x8x16xf32> to vector<2x8xf32>
    %194 = vector.shape_cast %193 : vector<2x8xf32> to vector<2x8x1xf32>
    %cst_43 = arith.constant 0.000000e+00 : f32
    %195 = vector.broadcast %cst_43 : f32 to vector<2x8x1xf32>
    %196 = arith.maximumf %194, %195 : vector<2x8x1xf32>
    %197 = vector.extract_strided_slice %11 {offsets = [0, 7, 0], sizes = [2, 1, 32], strides = [1, 1, 1]} : vector<2x8x32xf32> to vector<2x1x32xf32>
    %198 = vector.broadcast %189 : vector<2x8x1xf32> to vector<2x8x32xf32>
    %199 = vector.broadcast %197 : vector<2x1x32xf32> to vector<2x8x32xf32>
    %200 = arith.mulf %198, %199 : vector<2x8x32xf32>
    %201 = arith.addf %177, %200 : vector<2x8x32xf32>
    %202 = vector.extract_strided_slice %10 {offsets = [0, 7, 0], sizes = [2, 1, 32], strides = [1, 1, 1]} : vector<2x8x32xf32> to vector<2x1x32xf32>
    %203 = vector.broadcast %196 : vector<2x8x1xf32> to vector<2x8x32xf32>
    %204 = vector.broadcast %202 : vector<2x1x32xf32> to vector<2x8x32xf32>
    %205 = arith.mulf %203, %204 : vector<2x8x32xf32>
    %206 = arith.addf %182, %205 : vector<2x8x32xf32>
    %207 = arith.addf %10, %201 : vector<2x8x32xf32>
    %cst_44 = arith.constant 0.000000e+00 : f32
    %208 = vector.broadcast %cst_44 : f32 to vector<2x8x32xf32>
    %209 = arith.maximumf %207, %208 : vector<2x8x32xf32>
    %210 = arith.addf %11, %206 : vector<2x8x32xf32>
    %cst_45 = arith.constant 0.000000e+00 : f32
    %211 = vector.broadcast %cst_45 : f32 to vector<2x8x32xf32>
    %212 = arith.maximumf %210, %211 : vector<2x8x32xf32>
    %213 = vector.extract_strided_slice %4 {offsets = [0, 0], sizes = [1, 32], strides = [1, 1]} : vector<2x32xf32> to vector<1x32xf32>
    %214 = vector.shape_cast %213 : vector<1x32xf32> to vector<1x1x32xf32>
    %215 = vector.extract_strided_slice %4 {offsets = [1, 0], sizes = [1, 32], strides = [1, 1]} : vector<2x32xf32> to vector<1x32xf32>
    %216 = vector.shape_cast %215 : vector<1x32xf32> to vector<1x1x32xf32>
    %217 = vector.broadcast %214 : vector<1x1x32xf32> to vector<2x8x32xf32>
    %218 = arith.mulf %209, %217 : vector<2x8x32xf32>
    %cst_46 = arith.constant dense<0.000000e+00> : vector<2x8xf32>
    %219 = vector.multi_reduction <add>, %218, %cst_46 [2] : vector<2x8x32xf32> to vector<2x8xf32>
    %220 = vector.broadcast %216 : vector<1x1x32xf32> to vector<2x8x32xf32>
    %221 = arith.mulf %212, %220 : vector<2x8x32xf32>
    %cst_47 = arith.constant dense<0.000000e+00> : vector<2x8xf32>
    %222 = vector.multi_reduction <add>, %221, %cst_47 [2] : vector<2x8x32xf32> to vector<2x8xf32>
    %cst_48 = arith.constant dense<0xFF800000> : vector<2xf32>
    %223 = vector.multi_reduction <maximumf>, %219, %cst_48 [1] : vector<2x8xf32> to vector<2xf32>
    %224 = vector.shape_cast %223 : vector<2xf32> to vector<2x1xf32>
    %225 = vector.broadcast %224 : vector<2x1xf32> to vector<2x8xf32>
    %226 = arith.subf %219, %225 : vector<2x8xf32>
    %227 = math.exp %226 : vector<2x8xf32>
    %cst_49 = arith.constant dense<0.000000e+00> : vector<2xf32>
    %228 = vector.multi_reduction <add>, %227, %cst_49 [1] : vector<2x8xf32> to vector<2xf32>
    %229 = vector.shape_cast %228 : vector<2xf32> to vector<2x1xf32>
    %230 = tpu.reciprocal %229 {approx = true} : vector<2x1xf32> -> vector<2x1xf32>
    %231 = vector.broadcast %230 : vector<2x1xf32> to vector<2x8xf32>
    %232 = arith.mulf %227, %231 : vector<2x8xf32>
    %cst_50 = arith.constant dense<0xFF800000> : vector<2xf32>
    %233 = vector.multi_reduction <maximumf>, %222, %cst_50 [1] : vector<2x8xf32> to vector<2xf32>
    %234 = vector.shape_cast %233 : vector<2xf32> to vector<2x1xf32>
    %235 = vector.broadcast %234 : vector<2x1xf32> to vector<2x8xf32>
    %236 = arith.subf %222, %235 : vector<2x8xf32>
    %237 = math.exp %236 : vector<2x8xf32>
    %cst_51 = arith.constant dense<0.000000e+00> : vector<2xf32>
    %238 = vector.multi_reduction <add>, %237, %cst_51 [1] : vector<2x8xf32> to vector<2xf32>
    %239 = vector.shape_cast %238 : vector<2xf32> to vector<2x1xf32>
    %240 = tpu.reciprocal %239 {approx = true} : vector<2x1xf32> -> vector<2x1xf32>
    %241 = vector.broadcast %240 : vector<2x1xf32> to vector<2x8xf32>
    %242 = arith.mulf %237, %241 : vector<2x8xf32>
    %243 = tpu.concatenate %232, %242 in 1 : vector<2x8xf32>, vector<2x8xf32> -> vector<2x16xf32>
    %244 = tpu.iota {dimensions = array<i32: 0>} : vector<16x16xi32>
    %245 = tpu.iota {dimensions = array<i32: 1>} : vector<16x16xi32>
    %246 = arith.cmpi eq, %244, %245 : vector<16x16xi32>
    %cst_52 = arith.constant 1.000000e+00 : f32
    %cst_53 = arith.constant 0.000000e+00 : f32
    %247 = vector.broadcast %cst_52 : f32 to vector<16x16xf32>
    %248 = vector.broadcast %cst_53 : f32 to vector<16x16xf32>
    %249 = arith.select %246, %247, %248 : vector<16x16xi1>, vector<16x16xf32>
    %cst_54 = arith.constant dense<0.000000e+00> : vector<16x2xf32>
    %250 = tpu.matmul %249, %243, %cst_54 {dimension_numbers = #tpu.dot_dimension_numbers<[1], [1], [0], [0], [0, 0, 1, 0], [], []>} : vector<16x16xf32>, vector<2x16xf32>, vector<16x2xf32> -> vector<16x2xf32>
    %c0_55 = arith.constant 0 : index
    %c0_56 = arith.constant 0 : index
    %251 = vector.load %arg6[%c0_55, %c0_56] : memref<16x2xf32, #tpu.memory_space<vmem>>, vector<16x2xf32>
    tpu.vector_store %arg6[%c0_55, %c0_56], %250 {strides = array<i32>} : memref<16x2xf32, #tpu.memory_space<vmem>>, vector<16x2xf32>,
    return
  }
  func.func @transform_0(%arg0: i32) -> (i32, i32) {
    %c0_i32 = arith.constant 0 : i32
    %c0_i32_0 = arith.constant 0 : i32
    return %arg0, %c0_i32 : i32, i32
  }
  func.func @transform_1(%arg0: i32) -> (i32, i32) {
    %c0_i32 = arith.constant 0 : i32
    %c0_i32_0 = arith.constant 0 : i32
    return %arg0, %c0_i32 : i32, i32
  }
  func.func @transform_2(%arg0: i32) -> (i32, i32) {
    %c0_i32 = arith.constant 0 : i32
    %c0_i32_0 = arith.constant 0 : i32
    %c0_i32_1 = arith.constant 0 : i32
    return %c0_i32, %c0_i32_0 : i32, i32
  }
  func.func @transform_3(%arg0: i32) -> (i32, i32) {
    %c0_i32 = arith.constant 0 : i32
    %c0_i32_0 = arith.constant 0 : i32
    %c0_i32_1 = arith.constant 0 : i32
    return %c0_i32, %c0_i32_0 : i32, i32
  }
  func.func @transform_4(%arg0: i32) -> (i32, i32) {
    %c0_i32 = arith.constant 0 : i32
    %c0_i32_0 = arith.constant 0 : i32
    %c0_i32_1 = arith.constant 0 : i32
    return %c0_i32, %c0_i32_0 : i32, i32
  }
  func.func @transform_5(%arg0: i32) -> (i32, i32) {
    %c0_i32 = arith.constant 0 : i32
    %c0_i32_0 = arith.constant 0 : i32
    return %c0_i32, %arg0 : i32, i32
  }
}

</mosaic_0001>

<llo_original>
// kernel: tpu_custom_call.1
$region0: #{tpu_custom_call.1}
  #allocation0 [shape = 'u32[]', space=smem, size = 0x4, offset = 0x4, fixed_abs, tag = 'smem constant byte address 0x4 - core index']
  #allocation1 [shape = 'u32[72,128]{1,0:T(1,128)}', space=vmem, size = 0x9000, scoped, tag = 'internal scratch']
  %s0 = inlined_call_operand.hbm [shape: f32[2,128], index: 0, kind: input, shape index: {}]
  %s1 = inlined_call_operand.hbm [shape: f32[2,128], index: 1, kind: input, shape index: {}]
  %s2 = inlined_call_operand.hbm [shape: f32[128,384], index: 2, kind: input, shape index: {}]
  %s3 = inlined_call_operand.hbm [shape: f32[128,256], index: 3, kind: input, shape index: {}]
  %s4 = inlined_call_operand.vmem [shape: f32[2,32], index: 4, kind: input, shape index: {}]
  %s5 = inlined_call_operand.vmem [shape: f32[16,2], index: 5, kind: output, shape index: {}]
  %s6 = sld [smem:[#allocation0]]
  $region46: #{tpu_custom_call.1} parent=0
    _
  %s8 = ssub.s32 1, %s6
  %s9 = scalar_select 0, %s8, %s6
  $region1: #{tpu_custom_call.1} parent=0
    #allocation2 [shape = 'u8[1024]{0}', space=vmem, size = 0x400, scoped, tag = 'input window, operand 0, single buffered']
    #allocation3 [shape = 's32[1]{0}', space=sflag, size = 0x4, scoped, tag = 'scoped memory for tpu_custom_call.1']
    #allocation4 [shape = 'u8[1024]{0}', space=vmem, size = 0x400, scoped, tag = 'input window, operand 1, single buffered']
    #allocation5 [shape = 's32[1]{0}', space=sflag, size = 0x4, scoped, tag = 'scoped memory for tpu_custom_call.1']
    #allocation6 [shape = 'u8[196608]{0}', space=vmem, size = 0x30000, scoped, tag = 'input window, operand 2, single buffered']
    #allocation7 [shape = 'u8[131072]{0}', space=vmem, size = 0x20000, scoped, tag = 'input window, operand 3, single buffered']
    #allocation8 [shape = 's32[1]{0}', space=sflag, size = 0x4, scoped, tag = 'scoped memory for tpu_custom_call.1']
    %10 = vsyncpa [#allocation3], 0
    %11 = vsyncpa [#allocation5], 0
    %12 = vsyncpa [#allocation8], 0
    // Predicated region
    $region2: #{tpu_custom_call.1} parent=1 // pred_check
      _
    $region3: #{tpu_custom_call.1} parent=1 // pred_check_branch
      %14 = sbr.rel (0) target = $region5
    $region4: #{tpu_custom_call.1} parent=1 // pred_region
      %16 = vsyncadd [#allocation3], 0
      %s18 = sshll.u32 %s0, 4
      %s19 = int_to_ptr.hbm [resolvable:$true] %s18
      %s20 = sshll.u32 [#allocation2], 4
      %s21 = int_to_ptr.vmem [resolvable:$true] %s20
      %23 = dma.hbm_to_vmem [thread:$0]  %s19, 32, %s21, [#allocation3]
    $region5: #{tpu_custom_call.1} parent=1 // pred_fallthru
      _
    // Predicated region
    $region6: #{tpu_custom_call.1} parent=1 // pred_check
      _
    $region7: #{tpu_custom_call.1} parent=1 // pred_check_branch
      %25 = sbr.rel (0) target = $region9
    $region8: #{tpu_custom_call.1} parent=1 // pred_region
      %27 = vsyncadd [#allocation5], 0
      %s29 = sshll.u32 %s1, 4
      %s30 = int_to_ptr.hbm [resolvable:$true] %s29
      %s31 = sshll.u32 [#allocation4], 4
      %s32 = int_to_ptr.vmem [resolvable:$true] %s31
      %34 = dma.hbm_to_vmem [thread:$0]  %s30, 32, %s32, [#allocation5]
    $region9: #{tpu_custom_call.1} parent=1 // pred_fallthru
      _
    // Predicated region
    $region10: #{tpu_custom_call.1} parent=1 // pred_check
      _
    $region11: #{tpu_custom_call.1} parent=1 // pred_check_branch
      %36 = sbr.rel (0) target = $region13
    $region12: #{tpu_custom_call.1} parent=1 // pred_region
      %38 = vsyncadd [#allocation5], 0
      %s39 = sshll.u32 %s2, 4
      %s40 = int_to_ptr.hbm [resolvable:$true] %s39
      %s41 = sshll.u32 [#allocation6], 4
      %s42 = int_to_ptr.vmem [resolvable:$true] %s41
      %47 = dma.hbm_to_vmem [thread:$0]  %s40, 6144, %s42, [#allocation5], 384, 384, 24
    $region13: #{tpu_custom_call.1} parent=1 // pred_fallthru
      _
    // Predicated region
    $region14: #{tpu_custom_call.1} parent=1 // pred_check
      _
    $region15: #{tpu_custom_call.1} parent=1 // pred_check_branch
      %49 = sbr.rel (0) target = $region17
    $region16: #{tpu_custom_call.1} parent=1 // pred_region
      %51 = vsyncadd [#allocation8], 0
      %s52 = sshll.u32 %s3, 4
      %s53 = int_to_ptr.hbm [resolvable:$true] %s52
      %s54 = sshll.u32 [#allocation7], 4
      %s55 = int_to_ptr.vmem [resolvable:$true] %s54
      %60 = dma.hbm_to_vmem [thread:$0]  %s53, 4096, %s55, [#allocation8], 256, 256, 16
    $region17: #{tpu_custom_call.1} parent=1 // pred_fallthru
      _
    // Predicated region
    $region18: #{tpu_custom_call.1} parent=1 // pred_check
      _
    $region19: #{tpu_custom_call.1} parent=1 // pred_check_branch
      %62 = sbr.rel (0) target = $region21
    $region20: #{tpu_custom_call.1} parent=1 // pred_region
      _
    $region21: #{tpu_custom_call.1} parent=1 // pred_fallthru
      _
    // Predicated region
    $region22: #{tpu_custom_call.1} parent=1 // pred_check
      _
    $region23: #{tpu_custom_call.1} parent=1 // pred_check_branch
      %64 = sbr.rel (0) target = $region25
    $region24: #{tpu_custom_call.1} parent=1 // pred_region
      %66 = dma.done [#allocation3], 32
    $region25: #{tpu_custom_call.1} parent=1 // pred_fallthru
      _
    // Predicated region
    $region26: #{tpu_custom_call.1} parent=1 // pred_check
      _
    $region27: #{tpu_custom_call.1} parent=1 // pred_check_branch
      %68 = sbr.rel (0) target = $region29
    $region28: #{tpu_custom_call.1} parent=1 // pred_region
      %70 = dma.done [#allocation5], 32
    $region29: #{tpu_custom_call.1} parent=1 // pred_fallthru
      _
    // Predicated region
    $region30: #{tpu_custom_call.1} parent=1 // pred_check
      _
    $region31: #{tpu_custom_call.1} parent=1 // pred_check_branch
      %72 = sbr.rel (0) target = $region33
    $region32: #{tpu_custom_call.1} parent=1 // pred_region
      %74 = dma.done [#allocation5], 6144
    $region33: #{tpu_custom_call.1} parent=1 // pred_fallthru
      _
    // Predicated region
    $region34: #{tpu_custom_call.1} parent=1 // pred_check
      _
    $region35: #{tpu_custom_call.1} parent=1 // pred_check_branch
      %76 = sbr.rel (0) target = $region37
    $region36: #{tpu_custom_call.1} parent=1 // pred_region
      %78 = dma.done [#allocation8], 4096
    $region37: #{tpu_custom_call.1} parent=1 // pred_fallthru
      _
    %v79 = vld [vmem:[#allocation2] sm:$0x3]
    %v80 = vld [vmem:[#allocation4] sm:$0x3]
    %v81 = vld [vmem:[#allocation6] sm:$0xff]
    %v82 = vld [vmem:[#allocation6 + $0x8] sm:$0xff]
    %v83 = vld [vmem:[#allocation6 + $0x10] sm:$0xff]
    %v84 = vld [vmem:[#allocation6 + $0x18] sm:$0xff]
    %v85 = vld [vmem:[#allocation6 + $0x20] sm:$0xff]
    %v86 = vld [vmem:[#allocation6 + $0x28] sm:$0xff]
    %v87 = vld [vmem:[#allocation6 + $0x30] sm:$0xff]
    %v88 = vld [vmem:[#allocation6 + $0x38] sm:$0xff]
    %v89 = vld [vmem:[#allocation6 + $0x40] sm:$0xff]
    %v90 = vld [vmem:[#allocation6 + $0x48] sm:$0xff]
    %v91 = vld [vmem:[#allocation6 + $0x50] sm:$0xff]
    %v92 = vld [vmem:[#allocation6 + $0x58] sm:$0xff]
    %v93 = vld [vmem:[#allocation6 + $0x60] sm:$0xff]
    %v94 = vld [vmem:[#allocation6 + $0x68] sm:$0xff]
    %v95 = vld [vmem:[#allocation6 + $0x70] sm:$0xff]
    %v96 = vld [vmem:[#allocation6 + $0x78] sm:$0xff]
    %v97 = vld [vmem:[#allocation6 + $0x80] sm:$0xff]
    %v98 = vld [vmem:[#allocation6 + $0x88] sm:$0xff]
    %v99 = vld [vmem:[#allocation6 + $0x90] sm:$0xff]
    %v100 = vld [vmem:[#allocation6 + $0x98] sm:$0xff]
    %v101 = vld [vmem:[#allocation6 + $0xa0] sm:$0xff]
    %v102 = vld [vmem:[#allocation6 + $0xa8] sm:$0xff]
    %v103 = vld [vmem:[#allocation6 + $0xb0] sm:$0xff]
    %v104 = vld [vmem:[#allocation6 + $0xb8] sm:$0xff]
    %v105 = vld [vmem:[#allocation6 + $0xc0] sm:$0xff]
    %v106 = vld [vmem:[#allocation6 + $0xc8] sm:$0xff]
    %v107 = vld [vmem:[#allocation6 + $0xd0] sm:$0xff]
    %v108 = vld [vmem:[#allocation6 + $0xd8] sm:$0xff]
    %v109 = vld [vmem:[#allocation6 + $0xe0] sm:$0xff]
    %v110 = vld [vmem:[#allocation6 + $0xe8] sm:$0xff]
    %v111 = vld [vmem:[#allocation6 + $0xf0] sm:$0xff]
    %v112 = vld [vmem:[#allocation6 + $0xf8] sm:$0xff]
    %v113 = vld [vmem:[#allocation6 + $0x100] sm:$0xff]
    %v114 = vld [vmem:[#allocation6 + $0x108] sm:$0xff]
    %v115 = vld [vmem:[#allocation6 + $0x110] sm:$0xff]
    %v116 = vld [vmem:[#allocation6 + $0x118] sm:$0xff]
    %v117 = vld [vmem:[#allocation6 + $0x120] sm:$0xff]
    %v118 = vld [vmem:[#allocation6 + $0x128] sm:$0xff]
    %v119 = vld [vmem:[#allocation6 + $0x130] sm:$0xff]
    %v120 = vld [vmem:[#allocation6 + $0x138] sm:$0xff]
    %v121 = vld [vmem:[#allocation6 + $0x140] sm:$0xff]
    %v122 = vld [vmem:[#allocation6 + $0x148] sm:$0xff]
    %v123 = vld [vmem:[#allocation6 + $0x150] sm:$0xff]
    %v124 = vld [vmem:[#allocation6 + $0x158] sm:$0xff]
    %v125 = vld [vmem:[#allocation6 + $0x160] sm:$0xff]
    %v126 = vld [vmem:[#allocation6 + $0x168] sm:$0xff]
    %v127 = vld [vmem:[#allocation6 + $0x170] sm:$0xff]
    %v128 = vld [vmem:[#allocation6 + $0x178] sm:$0xff]
    %v129 = vld [vmem:[#allocation7] sm:$0xff]
    %v130 = vld [vmem:[#allocation7 + $0x8] sm:$0xff]
    %v131 = vld [vmem:[#allocation7 + $0x10] sm:$0xff]
    %v132 = vld [vmem:[#allocation7 + $0x18] sm:$0xff]
    %v133 = vld [vmem:[#allocation7 + $0x20] sm:$0xff]
    %v134 = vld [vmem:[#allocation7 + $0x28] sm:$0xff]
    %v135 = vld [vmem:[#allocation7 + $0x30] sm:$0xff]
    %v136 = vld [vmem:[#allocation7 + $0x38] sm:$0xff]
    %v137 = vld [vmem:[#allocation7 + $0x40] sm:$0xff]
    %v138 = vld [vmem:[#allocation7 + $0x48] sm:$0xff]
    %v139 = vld [vmem:[#allocation7 + $0x50] sm:$0xff]
    %v140 = vld [vmem:[#allocation7 + $0x58] sm:$0xff]
    %v141 = vld [vmem:[#allocation7 + $0x60] sm:$0xff]
    %v142 = vld [vmem:[#allocation7 + $0x68] sm:$0xff]
    %v143 = vld [vmem:[#allocation7 + $0x70] sm:$0xff]
    %v144 = vld [vmem:[#allocation7 + $0x78] sm:$0xff]
    %v145 = vld [vmem:[#allocation7 + $0x80] sm:$0xff]
    %v146 = vld [vmem:[#allocation7 + $0x88] sm:$0xff]
    %v147 = vld [vmem:[#allocation7 + $0x90] sm:$0xff]
    %v148 = vld [vmem:[#allocation7 + $0x98] sm:$0xff]
    %v149 = vld [vmem:[#allocation7 + $0xa0] sm:$0xff]
    %v150 = vld [vmem:[#allocation7 + $0xa8] sm:$0xff]
    %v151 = vld [vmem:[#allocation7 + $0xb0] sm:$0xff]
    %v152 = vld [vmem:[#allocation7 + $0xb8] sm:$0xff]
    %v153 = vld [vmem:[#allocation7 + $0xc0] sm:$0xff]
    %v154 = vld [vmem:[#allocation7 + $0xc8] sm:$0xff]
    %v155 = vld [vmem:[#allocation7 + $0xd0] sm:$0xff]
    %v156 = vld [vmem:[#allocation7 + $0xd8] sm:$0xff]
    %v157 = vld [vmem:[#allocation7 + $0xe0] sm:$0xff]
    %v158 = vld [vmem:[#allocation7 + $0xe8] sm:$0xff]
    %v159 = vld [vmem:[#allocation7 + $0xf0] sm:$0xff]
    %v160 = vld [vmem:[#allocation7 + $0xf8] sm:$0xff]
    %v161 = vld [vmem:[%s4] sm:$0x3]
    %162 = vmatpush.msra.mxu0 %v126
    %163 = vmatpush.msra.mxu0 %v123
    %164 = vmatpush.msra.mxu0 %v120
    %165 = vmatpush.msra.mxu0 %v117
    %166 = vmatpush.msra.mxu0 %v114
    %167 = vmatpush.msra.mxu0 %v111
    %168 = vmatpush.msra.mxu0 %v108
    %169 = vmatpush.msra.mxu0 %v105
    %170 = vmatpush.msra.mxu0 %v102
    %171 = vmatpush.msra.mxu0 %v99
    %172 = vmatpush.msra.mxu0 %v96
    %173 = vmatpush.msra.mxu0 %v93
    %174 = vmatpush.msra.mxu0 %v90
    %175 = vmatpush.msra.mxu0 %v87
    %176 = vmatpush.msra.mxu0 %v84
    %177 = vmatpush.msra.mxu0 %v81
    %178 = vmatmul.f32.gmra.mxu0 %v79
    %v179 = vpop.f32.mrf.mxu0
    %v180 = vadd.f32 0.0, %v179
    %181 = vdwg.mxu0
    %182 = vmatpush.msra.mxu0 %v127
    %183 = vmatpush.msra.mxu0 %v124
    %184 = vmatpush.msra.mxu0 %v121
    %185 = vmatpush.msra.mxu0 %v118
    %186 = vmatpush.msra.mxu0 %v115
    %187 = vmatpush.msra.mxu0 %v112
    %188 = vmatpush.msra.mxu0 %v109
    %189 = vmatpush.msra.mxu0 %v106
    %190 = vmatpush.msra.mxu0 %v103
    %191 = vmatpush.msra.mxu0 %v100
    %192 = vmatpush.msra.mxu0 %v97
    %193 = vmatpush.msra.mxu0 %v94
    %194 = vmatpush.msra.mxu0 %v91
    %195 = vmatpush.msra.mxu0 %v88
    %196 = vmatpush.msra.mxu0 %v85
    %197 = vmatpush.msra.mxu0 %v82
    %198 = vmatmul.f32.gmra.mxu0 %v79
    %v199 = vpop.f32.mrf.mxu0
    %v200 = vadd.f32 0.0, %v199
    %201 = vdwg.mxu0
    %202 = vmatpush.msra.mxu0 %v128
    %203 = vmatpush.msra.mxu0 %v125
    %204 = vmatpush.msra.mxu0 %v122
    %205 = vmatpush.msra.mxu0 %v119
    %206 = vmatpush.msra.mxu0 %v116
    %207 = vmatpush.msra.mxu0 %v113
    %208 = vmatpush.msra.mxu0 %v110
    %209 = vmatpush.msra.mxu0 %v107
    %210 = vmatpush.msra.mxu0 %v104
    %211 = vmatpush.msra.mxu0 %v101
    %212 = vmatpush.msra.mxu0 %v98
    %213 = vmatpush.msra.mxu0 %v95
    %214 = vmatpush.msra.mxu0 %v92
    %215 = vmatpush.msra.mxu0 %v89
    %216 = vmatpush.msra.mxu0 %v86
    %217 = vmatpush.msra.mxu0 %v83
    %218 = vmatmul.f32.gmra.mxu0 %v79
    %v219 = vpop.f32.mrf.mxu0
    %v220 = vadd.f32 0.0, %v219
    %221 = vdwg.mxu0
    %222 = vmatpush.msra.mxu0 %v159
    %223 = vmatpush.msra.mxu0 %v157
    %224 = vmatpush.msra.mxu0 %v155
    %225 = vmatpush.msra.mxu0 %v153
    %226 = vmatpush.msra.mxu0 %v151
    %227 = vmatpush.msra.mxu0 %v149
    %228 = vmatpush.msra.mxu0 %v147
    %229 = vmatpush.msra.mxu0 %v145
    %230 = vmatpush.msra.mxu0 %v143
    %231 = vmatpush.msra.mxu0 %v141
    %232 = vmatpush.msra.mxu0 %v139
    %233 = vmatpush.msra.mxu0 %v137
    %234 = vmatpush.msra.mxu0 %v135
    %235 = vmatpush.msra.mxu0 %v133
    %236 = vmatpush.msra.mxu0 %v131
    %237 = vmatpush.msra.mxu0 %v129
    %238 = vmatmul.f32.gmra.mxu0 %v80
    %v239 = vpop.f32.mrf.mxu0
    %v240 = vadd.f32 0.0, %v239
    %241 = vdwg.mxu0
    %242 = vmatpush.msra.mxu0 %v160
    %243 = vmatpush.msra.mxu0 %v158
    %244 = vmatpush.msra.mxu0 %v156
    %245 = vmatpush.msra.mxu0 %v154
    %246 = vmatpush.msra.mxu0 %v152
    %247 = vmatpush.msra.mxu0 %v150
    %248 = vmatpush.msra.mxu0 %v148
    %249 = vmatpush.msra.mxu0 %v146
    %250 = vmatpush.msra.mxu0 %v144
    %251 = vmatpush.msra.mxu0 %v142
    %252 = vmatpush.msra.mxu0 %v140
    %253 = vmatpush.msra.mxu0 %v138
    %254 = vmatpush.msra.mxu0 %v136
    %255 = vmatpush.msra.mxu0 %v134
    %256 = vmatpush.msra.mxu0 %v132
    %257 = vmatpush.msra.mxu0 %v130
    %258 = vmatmul.f32.gmra.mxu0 %v80
    %v259 = vpop.f32.mrf.mxu0
    %v260 = vadd.f32 0.0, %v259
    %261 = vdwg.mxu0
    %263 = vrot.lane.b32.xlu0 %v180, 112
    %v264 = vpop.permute.xlu0 %263
    %266 = vrot.lane.b32.xlu0 %v180, 96
    %v267 = vpop.permute.xlu0 %266
    %269 = vrot.lane.b32.xlu0 %v180, 80
    %v270 = vpop.permute.xlu0 %269
    %272 = vrot.lane.b32.xlu0 %v180, 64
    %v273 = vpop.permute.xlu0 %272
    %275 = vrot.lane.b32.xlu0 %v180, 48
    %v276 = vpop.permute.xlu0 %275
    %278 = vrot.lane.b32.xlu0 %v180, 32
    %v279 = vpop.permute.xlu0 %278
    %281 = vrot.lane.b32.xlu0 %v180, 16
    %v282 = vpop.permute.xlu0 %281
    %v284 = vrot.slane %v267, 4
    %vm285 = vcmask 1047556
    %v286 = vsel %vm285, %v284, %v180
    %v288 = vunpack.c.l.s4 1983009808
    %v289 = vunpack.c.0.s8 %v288
    %v290 = vperm.slane %v286, %v289
    %v291 = vrot.slane %v270, 4
    %v292 = vsel %vm285, %v291, %v264
    %v294 = vunpack.c.l.s4 1983009808
    %v295 = vunpack.c.0.s8 %v294
    %v296 = vperm.slane %v292, %v295
    %v297 = vrot.slane %v279, 4
    %v298 = vsel %vm285, %v297, %v273
    %v300 = vunpack.c.l.s4 1983009808
    %v301 = vunpack.c.0.s8 %v300
    %v302 = vperm.slane %v298, %v301
    %v303 = vrot.slane %v282, 4
    %v304 = vsel %vm285, %v303, %v276
    %v306 = vunpack.c.l.s4 1983009808
    %v307 = vunpack.c.0.s8 %v306
    %v308 = vperm.slane %v304, %v307
    %v309 = vrot.slane %v296, 4
    %v310 = vsel %vm285, %v309, %v290
    %v312 = vunpack.c.l.s4 1934713408
    %v313 = vunpack.c.0.s8 %v312
    %v314 = vperm.slane %v310, %v313
    %v315 = vrot.slane %v308, 4
    %v316 = vsel %vm285, %v315, %v302
    %v318 = vunpack.c.l.s4 1934713408
    %v319 = vunpack.c.0.s8 %v318
    %v320 = vperm.slane %v316, %v319
    %v321 = vrot.slane %v320, 4
    %v322 = vsel %vm285, %v321, %v314
    %v323 = vrot.slane %v314, 4
    %v324 = vsel %vm285, %v320, %v323
    %326 = vrot.lane.b32.xlu0 %v200, 96
    %v327 = vpop.permute.xlu0 %326
    %329 = vrot.lane.b32.xlu0 %v200, 64
    %v330 = vpop.permute.xlu0 %329
    %332 = vrot.lane.b32.xlu0 %v200, 32
    %v333 = vpop.permute.xlu0 %332
    %336 = vrot.lane.b32.xlu0 %v220, 96
    %v337 = vpop.permute.xlu0 %336
    %339 = vrot.lane.b32.xlu0 %v220, 64
    %v340 = vpop.permute.xlu0 %339
    %342 = vrot.lane.b32.xlu0 %v220, 32
    %v343 = vpop.permute.xlu0 %342
    %v345 = vrot.slane %v330, 4
    %v346 = vsel %vm285, %v345, %v200
    %v348 = vunpack.c.l.s4 1983009808
    %v349 = vunpack.c.0.s8 %v348
    %v350 = vperm.slane %v346, %v349
    %v351 = vrot.slane %v333, 4
    %v352 = vsel %vm285, %v351, %v327
    %v354 = vunpack.c.l.s4 1983009808
    %v355 = vunpack.c.0.s8 %v354
    %v356 = vperm.slane %v352, %v355
    %v357 = vrot.slane %v340, 4
    %v358 = vsel %vm285, %v357, %v220
    %v360 = vunpack.c.l.s4 1983009808
    %v361 = vunpack.c.0.s8 %v360
    %v362 = vperm.slane %v358, %v361
    %v363 = vrot.slane %v343, 4
    %v364 = vsel %vm285, %v363, %v337
    %v366 = vunpack.c.l.s4 1983009808
    %v367 = vunpack.c.0.s8 %v366
    %v368 = vperm.slane %v364, %v367
    %v369 = vrot.slane %v356, 4
    %v370 = vsel %vm285, %v369, %v350
    %v372 = vunpack.c.l.s4 1934713408
    %v373 = vunpack.c.0.s8 %v372
    %v374 = vperm.slane %v370, %v373
    %v375 = vrot.slane %v368, 4
    %v376 = vsel %vm285, %v375, %v362
    %v378 = vunpack.c.l.s4 1934713408
    %v379 = vunpack.c.0.s8 %v378
    %v380 = vperm.slane %v376, %v379
    %v381 = vrot.slane %v380, 4
    %v382 = vsel %vm285, %v381, %v374
    %v383 = vrot.slane %v374, 4
    %v384 = vsel %vm285, %v380, %v383
    %386 = vrot.lane.b32.xlu0 %v240, 96
    %v387 = vpop.permute.xlu0 %386
    %389 = vrot.lane.b32.xlu0 %v240, 64
    %v390 = vpop.permute.xlu0 %389
    %392 = vrot.lane.b32.xlu0 %v240, 32
    %v393 = vpop.permute.xlu0 %392
    %396 = vrot.lane.b32.xlu0 %v260, 96
    %v397 = vpop.permute.xlu0 %396
    %399 = vrot.lane.b32.xlu0 %v260, 64
    %v400 = vpop.permute.xlu0 %399
    %402 = vrot.lane.b32.xlu0 %v260, 32
    %v403 = vpop.permute.xlu0 %402
    %v405 = vrot.slane %v390, 4
    %v406 = vsel %vm285, %v405, %v240
    %v408 = vunpack.c.l.s4 1983009808
    %v409 = vunpack.c.0.s8 %v408
    %v410 = vperm.slane %v406, %v409
    %v411 = vrot.slane %v393, 4
    %v412 = vsel %vm285, %v411, %v387
    %v414 = vunpack.c.l.s4 1983009808
    %v415 = vunpack.c.0.s8 %v414
    %v416 = vperm.slane %v412, %v415
    %v417 = vrot.slane %v400, 4
    %v418 = vsel %vm285, %v417, %v260
    %v420 = vunpack.c.l.s4 1983009808
    %v421 = vunpack.c.0.s8 %v420
    %v422 = vperm.slane %v418, %v421
    %v423 = vrot.slane %v403, 4
    %v424 = vsel %vm285, %v423, %v397
    %v426 = vunpack.c.l.s4 1983009808
    %v427 = vunpack.c.0.s8 %v426
    %v428 = vperm.slane %v424, %v427
    %v429 = vrot.slane %v416, 4
    %v430 = vsel %vm285, %v429, %v410
    %v432 = vunpack.c.l.s4 1934713408
    %v433 = vunpack.c.0.s8 %v432
    %v434 = vperm.slane %v430, %v433
    %v435 = vrot.slane %v428, 4
    %v436 = vsel %vm285, %v435, %v422
    %v438 = vunpack.c.l.s4 1934713408
    %v439 = vunpack.c.0.s8 %v438
    %v440 = vperm.slane %v436, %v439
    %v441 = vrot.slane %v440, 4
    %v442 = vsel %vm285, %v441, %v434
    %v443 = vrot.slane %v434, 4
    %v444 = vsel %vm285, %v440, %v443
    %446 = vrot.lane.b32.xlu0 %v80, 112
    %v447 = vpop.permute.xlu0 %446
    %449 = vrot.lane.b32.xlu0 %v80, 96
    %v450 = vpop.permute.xlu0 %449
    %452 = vrot.lane.b32.xlu0 %v80, 80
    %v453 = vpop.permute.xlu0 %452
    %455 = vrot.lane.b32.xlu0 %v80, 64
    %v456 = vpop.permute.xlu0 %455
    %458 = vrot.lane.b32.xlu0 %v80, 48
    %v459 = vpop.permute.xlu0 %458
    %461 = vrot.lane.b32.xlu0 %v80, 32
    %v462 = vpop.permute.xlu0 %461
    %464 = vrot.lane.b32.xlu0 %v80, 16
    %v465 = vpop.permute.xlu0 %464
    %v467 = vrot.slane %v450, 4
    %v468 = vsel %vm285, %v467, %v80
    %v470 = vunpack.c.l.s4 1983009808
    %v471 = vunpack.c.0.s8 %v470
    %v472 = vperm.slane %v468, %v471
    %v473 = vrot.slane %v453, 4
    %v474 = vsel %vm285, %v473, %v447
    %v476 = vunpack.c.l.s4 1983009808
    %v477 = vunpack.c.0.s8 %v476
    %v478 = vperm.slane %v474, %v477
    %v479 = vrot.slane %v462, 4
    %v480 = vsel %vm285, %v479, %v456
    %v482 = vunpack.c.l.s4 1983009808
    %v483 = vunpack.c.0.s8 %v482
    %v484 = vperm.slane %v480, %v483
    %v485 = vrot.slane %v465, 4
    %v486 = vsel %vm285, %v485, %v459
    %v488 = vunpack.c.l.s4 1983009808
    %v489 = vunpack.c.0.s8 %v488
    %v490 = vperm.slane %v486, %v489
    %v491 = vrot.slane %v478, 4
    %v492 = vsel %vm285, %v491, %v472
    %v494 = vunpack.c.l.s4 1934713408
    %v495 = vunpack.c.0.s8 %v494
    %v496 = vperm.slane %v492, %v495
    %v497 = vrot.slane %v490, 4
    %v498 = vsel %vm285, %v497, %v484
    %v500 = vunpack.c.l.s4 1934713408
    %v501 = vunpack.c.0.s8 %v500
    %v502 = vperm.slane %v498, %v501
    %v503 = vrot.slane %v502, 4
    %v504 = vsel %vm285, %v503, %v496
    %v505 = vrot.slane %v496, 4
    %v506 = vsel %vm285, %v502, %v505
    %v507 = vperm.slane %v322, 0
    %v508 = vperm.slane %v324, 0
    %v509 = vmul.f32 %v507, %v504
    %v510 = vmul.f32 %v508, %v506
    %vm511 = vcmask 130048
    %v512 = vsel %vm511, %v509, 0.0
    %513 = vadd.xlane.f32.xlu0 %v512
    %v514 = vpop.xlane.xlu0 %513
    %v515 = vsel %vm511, %v510, 0.0
    %516 = vadd.xlane.f32.xlu0 %v515
    %v517 = vpop.xlane.xlu0 %516
    %v518 = vmax.f32 %v514, 0.0
    %v519 = vmax.f32 %v517, 0.0
    %v520 = vperm.slane %v504, 0
    %v521 = vperm.slane %v506, 0
    %v522 = vmul.f32 %v322, %v520
    %v523 = vmul.f32 %v324, %v521
    %v524 = vsel %vm511, %v522, 0.0
    %525 = vadd.xlane.f32.xlu0 %v524
    %v526 = vpop.xlane.xlu0 %525
    %v527 = vsel %vm511, %v523, 0.0
    %528 = vadd.xlane.f32.xlu0 %v527
    %v529 = vpop.xlane.xlu0 %528
    %v530 = vmax.f32 %v526, 0.0
    %v531 = vmax.f32 %v529, 0.0
    %v532 = vperm.slane %v442, 0
    %v533 = vperm.slane %v444, 0
    %v534 = vmul.f32 %v518, %v532
    %v535 = vmul.f32 %v519, %v533
    %v536 = vadd.f32 %v534, 0.0
    %v537 = vadd.f32 %v535, 0.0
    %v538 = vperm.slane %v382, 0
    %v539 = vperm.slane %v384, 0
    %v540 = vmul.f32 %v530, %v538
    %v541 = vmul.f32 %v531, %v539
    %v542 = vadd.f32 %v540, 0.0
    %v543 = vadd.f32 %v541, 0.0
    %v544 = vperm.slane %v322, 1
    %v545 = vperm.slane %v324, 1
    %v546 = vmul.f32 %v544, %v504
    %v547 = vmul.f32 %v545, %v506
    %v548 = vsel %vm511, %v546, 0.0
    %549 = vadd.xlane.f32.xlu0 %v548
    %v550 = vpop.xlane.xlu0 %549
    %v551 = vsel %vm511, %v547, 0.0
    %552 = vadd.xlane.f32.xlu0 %v551
    %v553 = vpop.xlane.xlu0 %552
    %v554 = vmax.f32 %v550, 0.0
    %v555 = vmax.f32 %v553, 0.0
    %v556 = vperm.slane %v504, 1
    %v557 = vperm.slane %v506, 1
    %v558 = vmul.f32 %v322, %v556
    %v559 = vmul.f32 %v324, %v557
    %v560 = vsel %vm511, %v558, 0.0
    %561 = vadd.xlane.f32.xlu0 %v560
    %v562 = vpop.xlane.xlu0 %561
    %v563 = vsel %vm511, %v559, 0.0
    %564 = vadd.xlane.f32.xlu0 %v563
    %v565 = vpop.xlane.xlu0 %564
    %v566 = vmax.f32 %v562, 0.0
    %v567 = vmax.f32 %v565, 0.0
    %v568 = vperm.slane %v442, 1
    %v569 = vperm.slane %v444, 1
    %v570 = vmul.f32 %v554, %v568
    %v571 = vmul.f32 %v555, %v569
    %v572 = vadd.f32 %v536, %v570
    %v573 = vadd.f32 %v537, %v571
    %v574 = vperm.slane %v382, 1
    %v575 = vperm.slane %v384, 1
    %v576 = vmul.f32 %v566, %v574
    %v577 = vmul.f32 %v567, %v575
    %v578 = vadd.f32 %v542, %v576
    %v579 = vadd.f32 %v543, %v577
    %v580 = vperm.slane %v322, 2
    %v581 = vperm.slane %v324, 2
    %v582 = vmul.f32 %v580, %v504
    %v583 = vmul.f32 %v581, %v506
    %v584 = vsel %vm511, %v582, 0.0
    %585 = vadd.xlane.f32.xlu0 %v584
    %v586 = vpop.xlane.xlu0 %585
    %v587 = vsel %vm511, %v583, 0.0
    %588 = vadd.xlane.f32.xlu0 %v587
    %v589 = vpop.xlane.xlu0 %588
    %v590 = vmax.f32 %v586, 0.0
    %v591 = vmax.f32 %v589, 0.0
    %v592 = vperm.slane %v504, 2
    %v593 = vperm.slane %v506, 2
    %v594 = vmul.f32 %v322, %v592
    %v595 = vmul.f32 %v324, %v593
    %v596 = vsel %vm511, %v594, 0.0
    %597 = vadd.xlane.f32.xlu0 %v596
    %v598 = vpop.xlane.xlu0 %597
    %v599 = vsel %vm511, %v595, 0.0
    %600 = vadd.xlane.f32.xlu0 %v599
    %v601 = vpop.xlane.xlu0 %600
    %v602 = vmax.f32 %v598, 0.0
    %v603 = vmax.f32 %v601, 0.0
    %v604 = vperm.slane %v442, 2
    %v605 = vperm.slane %v444, 2
    %v606 = vmul.f32 %v590, %v604
    %v607 = vmul.f32 %v591, %v605
    %v608 = vadd.f32 %v572, %v606
    %v609 = vadd.f32 %v573, %v607
    %v610 = vperm.slane %v382, 2
    %v611 = vperm.slane %v384, 2
    %v612 = vmul.f32 %v602, %v610
    %v613 = vmul.f32 %v603, %v611
    %v614 = vadd.f32 %v578, %v612
    %v615 = vadd.f32 %v579, %v613
    %v616 = vperm.slane %v322, 3
    %v617 = vperm.slane %v324, 3
    %v618 = vmul.f32 %v616, %v504
    %v619 = vmul.f32 %v617, %v506
    %v620 = vsel %vm511, %v618, 0.0
    %621 = vadd.xlane.f32.xlu0 %v620
    %v622 = vpop.xlane.xlu0 %621
    %v623 = vsel %vm511, %v619, 0.0
    %624 = vadd.xlane.f32.xlu0 %v623
    %v625 = vpop.xlane.xlu0 %624
    %v626 = vmax.f32 %v622, 0.0
    %v627 = vmax.f32 %v625, 0.0
    %v628 = vperm.slane %v504, 3
    %v629 = vperm.slane %v506, 3
    %v630 = vmul.f32 %v322, %v628
    %v631 = vmul.f32 %v324, %v629
    %v632 = vsel %vm511, %v630, 0.0
    %633 = vadd.xlane.f32.xlu0 %v632
    %v634 = vpop.xlane.xlu0 %633
    %v635 = vsel %vm511, %v631, 0.0
    %636 = vadd.xlane.f32.xlu0 %v635
    %v637 = vpop.xlane.xlu0 %636
    %v638 = vmax.f32 %v634, 0.0
    %v639 = vmax.f32 %v637, 0.0
    %v640 = vperm.slane %v442, 3
    %v641 = vperm.slane %v444, 3
    %v642 = vmul.f32 %v626, %v640
    %v643 = vmul.f32 %v627, %v641
    %v644 = vadd.f32 %v608, %v642
    %v645 = vadd.f32 %v609, %v643
    %v646 = vperm.slane %v382, 3
    %v647 = vperm.slane %v384, 3
    %v648 = vmul.f32 %v638, %v646
    %v649 = vmul.f32 %v639, %v647
    %v650 = vadd.f32 %v614, %v648
    %v651 = vadd.f32 %v615, %v649
    %v652 = vperm.slane %v322, 4
    %v653 = vperm.slane %v324, 4
    %v654 = vmul.f32 %v652, %v504
    %v655 = vmul.f32 %v653, %v506
    %v656 = vsel %vm511, %v654, 0.0
    %657 = vadd.xlane.f32.xlu0 %v656
    %v658 = vpop.xlane.xlu0 %657
    %v659 = vsel %vm511, %v655, 0.0
    %660 = vadd.xlane.f32.xlu0 %v659
    %v661 = vpop.xlane.xlu0 %660
    %v662 = vmax.f32 %v658, 0.0
    %v663 = vmax.f32 %v661, 0.0
    %v664 = vperm.slane %v504, 4
    %v665 = vperm.slane %v506, 4
    %v666 = vmul.f32 %v322, %v664
    %v667 = vmul.f32 %v324, %v665
    %v668 = vsel %vm511, %v666, 0.0
    %669 = vadd.xlane.f32.xlu0 %v668
    %v670 = vpop.xlane.xlu0 %669
    %v671 = vsel %vm511, %v667, 0.0
    %672 = vadd.xlane.f32.xlu0 %v671
    %v673 = vpop.xlane.xlu0 %672
    %v674 = vmax.f32 %v670, 0.0
    %v675 = vmax.f32 %v673, 0.0
    %v676 = vperm.slane %v442, 4
    %v677 = vperm.slane %v444, 4
    %v678 = vmul.f32 %v662, %v676
    %v679 = vmul.f32 %v663, %v677
    %v680 = vadd.f32 %v644, %v678
    %v681 = vadd.f32 %v645, %v679
    %v682 = vperm.slane %v382, 4
    %v683 = vperm.slane %v384, 4
    %v684 = vmul.f32 %v674, %v682
    %v685 = vmul.f32 %v675, %v683
    %v686 = vadd.f32 %v650, %v684
    %v687 = vadd.f32 %v651, %v685
    %v688 = vperm.slane %v322, 5
    %v689 = vperm.slane %v324, 5
    %v690 = vmul.f32 %v688, %v504
    %v691 = vmul.f32 %v689, %v506
    %v692 = vsel %vm511, %v690, 0.0
    %693 = vadd.xlane.f32.xlu0 %v692
    %v694 = vpop.xlane.xlu0 %693
    %v695 = vsel %vm511, %v691, 0.0
    %696 = vadd.xlane.f32.xlu0 %v695
    %v697 = vpop.xlane.xlu0 %696
    %v698 = vmax.f32 %v694, 0.0
    %v699 = vmax.f32 %v697, 0.0
    %v700 = vperm.slane %v504, 5
    %v701 = vperm.slane %v506, 5
    %v702 = vmul.f32 %v322, %v700
    %v703 = vmul.f32 %v324, %v701
    %v704 = vsel %vm511, %v702, 0.0
    %705 = vadd.xlane.f32.xlu0 %v704
    %v706 = vpop.xlane.xlu0 %705
    %v707 = vsel %vm511, %v703, 0.0
    %708 = vadd.xlane.f32.xlu0 %v707
    %v709 = vpop.xlane.xlu0 %708
    %v710 = vmax.f32 %v706, 0.0
    %v711 = vmax.f32 %v709, 0.0
    %v712 = vperm.slane %v442, 5
    %v713 = vperm.slane %v444, 5
    %v714 = vmul.f32 %v698, %v712
    %v715 = vmul.f32 %v699, %v713
    %v716 = vadd.f32 %v680, %v714
    %v717 = vadd.f32 %v681, %v715
    %v718 = vperm.slane %v382, 5
    %v719 = vperm.slane %v384, 5
    %v720 = vmul.f32 %v710, %v718
    %v721 = vmul.f32 %v711, %v719
    %v722 = vadd.f32 %v686, %v720
    %v723 = vadd.f32 %v687, %v721
    %v724 = vperm.slane %v322, 6
    %v725 = vperm.slane %v324, 6
    %v726 = vmul.f32 %v724, %v504
    %v727 = vmul.f32 %v725, %v506
    %v728 = vsel %vm511, %v726, 0.0
    %729 = vadd.xlane.f32.xlu0 %v728
    %v730 = vpop.xlane.xlu0 %729
    %v731 = vsel %vm511, %v727, 0.0
    %732 = vadd.xlane.f32.xlu0 %v731
    %v733 = vpop.xlane.xlu0 %732
    %v734 = vmax.f32 %v730, 0.0
    %v735 = vmax.f32 %v733, 0.0
    %v736 = vperm.slane %v504, 6
    %v737 = vperm.slane %v506, 6
    %v738 = vmul.f32 %v322, %v736
    %v739 = vmul.f32 %v324, %v737
    %v740 = vsel %vm511, %v738, 0.0
    %741 = vadd.xlane.f32.xlu0 %v740
    %v742 = vpop.xlane.xlu0 %741
    %v743 = vsel %vm511, %v739, 0.0
    %744 = vadd.xlane.f32.xlu0 %v743
    %v745 = vpop.xlane.xlu0 %744
    %v746 = vmax.f32 %v742, 0.0
    %v747 = vmax.f32 %v745, 0.0
    %v748 = vperm.slane %v442, 6
    %v749 = vperm.slane %v444, 6
    %v750 = vmul.f32 %v734, %v748
    %v751 = vmul.f32 %v735, %v749
    %v752 = vadd.f32 %v716, %v750
    %v753 = vadd.f32 %v717, %v751
    %v754 = vperm.slane %v382, 6
    %v755 = vperm.slane %v384, 6
    %v756 = vmul.f32 %v746, %v754
    %v757 = vmul.f32 %v747, %v755
    %v758 = vadd.f32 %v722, %v756
    %v759 = vadd.f32 %v723, %v757
    %v760 = vperm.slane %v322, 7
    %v761 = vperm.slane %v324, 7
    %v762 = vmul.f32 %v760, %v504
    %v763 = vmul.f32 %v761, %v506
    %v764 = vsel %vm511, %v762, 0.0
    %765 = vadd.xlane.f32.xlu0 %v764
    %v766 = vpop.xlane.xlu0 %765
    %v767 = vsel %vm511, %v763, 0.0
    %768 = vadd.xlane.f32.xlu0 %v767
    %v769 = vpop.xlane.xlu0 %768
    %v770 = vmax.f32 %v766, 0.0
    %v771 = vmax.f32 %v769, 0.0
    %v772 = vperm.slane %v504, 7
    %v773 = vperm.slane %v506, 7
    %v774 = vmul.f32 %v322, %v772
    %v775 = vmul.f32 %v324, %v773
    %v776 = vsel %vm511, %v774, 0.0
    %777 = vadd.xlane.f32.xlu0 %v776
    %v778 = vpop.xlane.xlu0 %777
    %v779 = vsel %vm511, %v775, 0.0
    %780 = vadd.xlane.f32.xlu0 %v779
    %v781 = vpop.xlane.xlu0 %780
    %v782 = vmax.f32 %v778, 0.0
    %v783 = vmax.f32 %v781, 0.0
    %v784 = vperm.slane %v442, 7
    %v785 = vperm.slane %v444, 7
    %v786 = vmul.f32 %v770, %v784
    %v787 = vmul.f32 %v771, %v785
    %v788 = vadd.f32 %v752, %v786
    %v789 = vadd.f32 %v753, %v787
    %v790 = vperm.slane %v382, 7
    %v791 = vperm.slane %v384, 7
    %v792 = vmul.f32 %v782, %v790
    %v793 = vmul.f32 %v783, %v791
    %v794 = vadd.f32 %v758, %v792
    %v795 = vadd.f32 %v759, %v793
    %v796 = vadd.f32 %v382, %v788
    %v797 = vadd.f32 %v384, %v789
    %v798 = vmax.f32 %v796, 0.0
    %v799 = vmax.f32 %v797, 0.0
    %v800 = vadd.f32 %v442, %v794
    %v801 = vadd.f32 %v444, %v795
    %v802 = vmax.f32 %v800, 0.0
    %v803 = vmax.f32 %v801, 0.0
    %v804 = vperm.slane %v161, 0
    %v805 = vmul.f32 %v798, %v804
    %v806 = vmul.f32 %v799, %v804
    %vm807 = vcmask 261120
    %v808 = vsel %vm807, %v805, 0.0
    %809 = vadd.xlane.f32.xlu0 %v808
    %v810 = vpop.xlane.xlu0 %809
    %v811 = vsel %vm807, %v806, 0.0
    %812 = vadd.xlane.f32.xlu0 %v811
    %v813 = vpop.xlane.xlu0 %812
    %v814 = vperm.slane %v161, 1
    %v815 = vmul.f32 %v802, %v814
    %v816 = vmul.f32 %v803, %v814
    %v817 = vsel %vm807, %v815, 0.0
    %818 = vadd.xlane.f32.xlu0 %v817
    %v819 = vpop.xlane.xlu0 %818
    %v820 = vsel %vm807, %v816, 0.0
    %821 = vadd.xlane.f32.xlu0 %v820
    %v822 = vpop.xlane.xlu0 %821
    %v825 = vlaneseq
    %v826 = vand.u32 %v825, 127
    %v827 = vperm.slane %v810, %v826
    %v828 = vperm.slane %v813, %v826
    %vm829 = vcmask 1041409
    %v830 = vsel %vm829, %v828, %v827
    %vm832 = vcmask 58368
    %v833 = vsel %vm832, %v830, -inf
    %834 = vmax.xlane.f32.xlu0 %v833
    %v835 = vpop.xlane.xlu0 %834
    %v837 = vperm.slane %v835, 0
    %v838 = vperm.slane %v835, 1
    %v841 = vsub.f32 %v810, %v837
    %v842 = vsub.f32 %v813, %v838
    %v843 = vmul.f32 %v841, 1.442695
    %v844 = vpow.pop %v843
    %v845 = vmul.f32 %v842, 1.442695
    %v846 = vpow.pop %v845
    %849 = vset.pattern.permute.xlu0 0
    %850 = vperm.xlu0 %849, %v844
    %v851 = vpop.permute.xlu0 %850
    %852 = vset.pattern.permute.xlu0 0
    %853 = vperm.xlu0 %852, %v846
    %v854 = vpop.permute.xlu0 %853
    %v855 = vperm.slane %v851, %v826
    %v856 = vperm.slane %v854, %v826
    %v857 = vsel %vm829, %v856, %v855
    %v859 = vsel %vm832, %v857, 0.0
    %860 = vadd.xlane.f32.xlu0 %v859
    %v861 = vpop.xlane.xlu0 %860
    %v862 = vrcp.pop %v861
    %v864 = vperm.slane %v862, 0
    %v865 = vperm.slane %v862, 1
    %v868 = vmul.f32 %v844, %v864
    %v869 = vmul.f32 %v846, %v865
    %v872 = vperm.slane %v819, %v826
    %v873 = vperm.slane %v822, %v826
    %v874 = vsel %vm829, %v873, %v872
    %v876 = vsel %vm832, %v874, -inf
    %877 = vmax.xlane.f32.xlu0 %v876
    %v878 = vpop.xlane.xlu0 %877
    %v880 = vperm.slane %v878, 0
    %v881 = vperm.slane %v878, 1
    %v884 = vsub.f32 %v819, %v880
    %v885 = vsub.f32 %v822, %v881
    %v886 = vmul.f32 %v884, 1.442695
    %v887 = vpow.pop %v886
    %v888 = vmul.f32 %v885, 1.442695
    %v889 = vpow.pop %v888
    %892 = vset.pattern.permute.xlu0 0
    %893 = vperm.xlu0 %892, %v887
    %v894 = vpop.permute.xlu0 %893
    %895 = vset.pattern.permute.xlu0 0
    %896 = vperm.xlu0 %895, %v889
    %v897 = vpop.permute.xlu0 %896
    %v898 = vperm.slane %v894, %v826
    %v899 = vperm.slane %v897, %v826
    %v900 = vsel %vm829, %v899, %v898
    %v902 = vsel %vm832, %v900, 0.0
    %903 = vadd.xlane.f32.xlu0 %v902
    %v904 = vpop.xlane.xlu0 %903
    %v905 = vrcp.pop %v904
    %v907 = vperm.slane %v905, 0
    %v908 = vperm.slane %v905, 1
    %v911 = vmul.f32 %v887, %v907
    %v912 = vmul.f32 %v889, %v908
    %915 = vset.pattern.permute.xlu0 0
    %916 = vperm.xlu0 %915, %v868
    %v917 = vpop.permute.xlu0 %916
    %918 = vset.pattern.permute.xlu0 0
    %919 = vperm.xlu0 %918, %v869
    %v920 = vpop.permute.xlu0 %919
    %v921 = vperm.slane %v917, %v826
    %v922 = vperm.slane %v920, %v826
    %v923 = vsel %vm829, %v922, %v921
    %927 = vset.pattern.permute.xlu0 0
    %928 = vperm.xlu0 %927, %v911
    %v929 = vpop.permute.xlu0 %928
    %930 = vset.pattern.permute.xlu0 0
    %931 = vperm.xlu0 %930, %v912
    %v932 = vpop.permute.xlu0 %931
    %v933 = vadd.s32 %v826, 4294967288
    %v934 = vperm.slane %v929, %v933
    %v935 = vperm.slane %v932, %v933
    %v936 = vsel %vm829, %v935, %v934
    %vm938 = vcmask 64512
    %v939 = vsel %vm938, %v923, %v936
    %v940 = vlaneseq
    %v941 = vshrl.u32 %v940, 7
    %v942 = vadd.s32 %v941, 8
    %vm943 = vcmp.eq.s32.totalorder %v941, %v826
    %vm944 = vcmp.eq.s32.totalorder %v942, %v826
    %v945 = vsel %vm943, 1.0, 0.0
    %v946 = vsel %vm944, 1.0, 0.0
    %v948 = vsel %vm511, %v945, 0
    %v951 = vsel %vm511, %v946, 0
    %v954 = vsel %vm511, %v939, 0
    %956 = vmatpush.xpose.msra.mxu0 0.0
    %957 = vmatpush.xpose.msra.mxu0 0.0
    %958 = vmatpush.xpose.msra.mxu0 0.0
    %959 = vmatpush.xpose.msra.mxu0 0.0
    %960 = vmatpush.xpose.msra.mxu0 0.0
    %961 = vmatpush.xpose.msra.mxu0 0.0
    %962 = vmatpush.xpose.msra.mxu0 0.0
    %963 = vmatpush.xpose.msra.mxu0 0.0
    %964 = vmatpush.xpose.msra.mxu0 0.0
    %965 = vmatpush.xpose.msra.mxu0 0.0
    %966 = vmatpush.xpose.msra.mxu0 0.0
    %967 = vmatpush.xpose.msra.mxu0 0.0
    %968 = vmatpush.xpose.msra.mxu0 0.0
    %969 = vmatpush.xpose.msra.mxu0 0.0
    %970 = vmatpush.xpose.msra.mxu0 0.0
    %971 = vmatpush.xpose.msra.mxu0 %v954
    %972 = vmatmul.f32.gmra.mxu0 %v948
    %v973 = vpop.f32.mrf.mxu0
    %v974 = vadd.f32 0.0, %v973
    %975 = vmatmul.f32.gmra.mxu0 %v951
    %v976 = vpop.f32.mrf.mxu0
    %v977 = vadd.f32 0.0, %v976
    %978 = vdwg.mxu0
    %vm979 = vcmask 15360
    %980 = vst.msk [vmem:[%s5] sm:$0xff] %vm979, %v974
    %981 = vst.msk [vmem:[%s5 + $0x8] sm:$0xff] %vm979, %v977
    // Predicated region
    $region38: #{tpu_custom_call.1} parent=1 // pred_check
      _
    $region39: #{tpu_custom_call.1} parent=1 // pred_check_branch
      %983 = sbr.rel (0) target = $region41
    $region40: #{tpu_custom_call.1} parent=1 // pred_region
      _
    $region41: #{tpu_custom_call.1} parent=1 // pred_fallthru
      _
    // Predicated region
    $region42: #{tpu_custom_call.1} parent=1 // pred_check
      _
    $region43: #{tpu_custom_call.1} parent=1 // pred_check_branch
      %985 = sbr.rel (0) target = $region45
    $region44: #{tpu_custom_call.1} parent=1 // pred_region
      _
    $region45: #{tpu_custom_call.1} parent=1 // pred_fallthru
      _
    %986 = vsyncpa [#allocation3], 1
    %987 = vsyncpa [#allocation5], 1
    %988 = vsyncpa [#allocation8], 1

</llo_original>
